<compile_context>
chip_gen: v7x
topology: tpu7x:2x2x1
jax: 0.10.0
libtpu: 0.0.40
codegen_flags: <defaults>
</compile_context>

<pallas_src>
import jax
import jax.numpy as jnp
from jax.experimental import pallas as pl
from jax.experimental.pallas import tpu as pltpu


_LANE = 128
_TARGET_BLOCK_BYTES = 4 * 1024 * 1024    # ~4 MiB blocks: roofline plateau, VMEM-safe everywhere
_VMEM_LIMIT_BYTES = 32 * 1024 * 1024     # covers in+out double-buffered 4 MiB blocks on all gens
_PALLAS_MIN_ELEMS = 1 << 16              # below ~256 KiB (f32) XLA's fused floor already wins


def _floor_kernel(x_ref, o_ref):
    # Elementwise floor on the whole VMEM tile (VPU).  Compute in f32 (exact
    # for floor of f32/bf16/f16 values; v5e has no bf16 VALU) while keeping
    # HBM traffic in the native dtype.
    x = x_ref[...]
    o_ref[...] = jnp.floor(x.astype(jnp.float32)).astype(o_ref.dtype)


def _round_up(v, m):
    return -(-v // m) * m


def _choose_tiles(n, itemsize):
    """Pick (rows, lane_width, row_tile) for a flat length-n array (n % 128 == 0)."""
    lane = _LANE
    for cand in (1024, 512, 256, 128):
        if n % cand == 0:
            lane = cand
            break
    rows = n // lane
    # Fat row tile targeting ~_TARGET_BLOCK_BYTES per block.
    tr = max(8, (_TARGET_BLOCK_BYTES // (lane * itemsize)) // 8 * 8)
    # Keep >= 2 grid steps when possible (v7x dual TensorCore sharding).
    if rows > 8:
        tr = min(tr, _round_up(-(-rows // 2), 8))
    tr = min(tr, rows)
    return rows, lane, tr


def _floor_pallas(x):
    """floor(x) via Pallas.  Requires x.size > 0 and x.size % 128 == 0."""
    n = x.size
    itemsize = jnp.dtype(x.dtype).itemsize
    rows, lane, tr = _choose_tiles(n, itemsize)
    x2d = x.reshape(rows, lane)              # free reshape: n == rows * lane
    grid = (pl.cdiv(rows, tr),)              # ragged last block is masked by Pallas
    y2d = pl.pallas_call(
        _floor_kernel,
        out_shape=jax.ShapeDtypeStruct((rows, lane), x.dtype),
        grid=grid,
        in_specs=[pl.BlockSpec((tr, lane), lambda i: (i, 0))],
        out_specs=pl.BlockSpec((tr, lane), lambda i: (i, 0)),
        compiler_params=pltpu.CompilerParams(
            dimension_semantics=("parallel",),
            vmem_limit_bytes=_VMEM_LIMIT_BYTES,
        ),
        cost_estimate=pl.CostEstimate(
            flops=n,
            transcendentals=0,
            bytes_accessed=2 * n * itemsize,
        ),
    )(x2d)
    return y2d.reshape(x.shape)


def _ste_forward(x):
    n = x.size
    if (n == 0
            or not jnp.issubdtype(x.dtype, jnp.floating)
            or n % _LANE != 0
            or n < _PALLAS_MIN_ELEMS):
        # Tiny / lane-misaligned / non-float inputs: XLA's fused elementwise
        # floor is a single read+write pass and already at the HBM roofline;
        # the Pallas launch + reshape plumbing would only add overhead.
        return jnp.floor(x).astype(x.dtype)
    return _floor_pallas(x)


@jax.custom_vjp
def straight_through_estimator(x):
    """Forward: floor(x). Backward: identity (straight-through)."""
    return _ste_forward(x)


def _ste_fwd(x):
    return _ste_forward(x), None


def _ste_bwd(_, g):
    # STEFunction.backward: grad_input = grad_output.clone()
    return (g,)


straight_through_estimator.defvjp(_ste_fwd, _ste_bwd)


if __name__ == "__main__":
    key = jax.random.PRNGKey(0)

    # Canonical small NCHW input: batch=2, channels=4, spatial=16x16.
    x = jax.random.normal(key, (2, 4, 16, 16), dtype=jnp.float32) * 3.0

    # Exercise the Pallas kernel directly on the small input.
    y_k = jax.block_until_ready(_floor_pallas(x))
    assert y_k.shape == x.shape and y_k.dtype == x.dtype
    assert jnp.array_equal(y_k, jnp.floor(x)), "Pallas floor mismatch (small)"

    # Public STE forward (takes the XLA fast path at this tiny size --
    # identical semantics).
    y = jax.block_until_ready(straight_through_estimator(x))
    assert y.shape == x.shape and y.dtype == x.dtype
    assert jnp.array_equal(y, jnp.floor(x)), "STE forward mismatch"

    # Straight-through gradient check: d/dx sum(STE(x)) == ones.
    g = jax.grad(lambda a: straight_through_estimator(a).sum())(x)
    g = jax.block_until_ready(g)
    assert jnp.array_equal(g, jnp.ones_like(x)), "STE gradient mismatch"

    # Larger input that routes through the fat-tile Pallas path (2 MiB blocks,
    # 2 grid steps).
    x_big = jax.random.normal(jax.random.PRNGKey(1), (8, 32, 64, 64),
                              dtype=jnp.float32) * 5.0
    y_big = jax.block_until_ready(straight_through_estimator(x_big))
    assert jnp.array_equal(y_big, jnp.floor(x_big)), "STE forward mismatch (big)"

    print("KERNEL_OK")
</pallas_src>

<mosaic_0001>
module attributes {stable_mosaic.version = 11 : i64} {
  func.func @_floor_kernel(%arg0: i32, %arg1: memref<2x1024xf32, #tpu.memory_space<vmem>>, %arg2: memref<2x1024xf32, #tpu.memory_space<vmem>>) attributes {dimension_semantics = [#tpu.dimension_semantics<parallel>], iteration_bounds = array<i64: 1>, scalar_prefetch = 0 : i64, scratch_operands = 0 : i64, tpu.core_type = #tpu.core_type<tc>, window_params = [{transform_indices = @transform_0, window_bounds = array<i64: 2, 1024>}, {transform_indices = @transform_1, window_bounds = array<i64: 2, 1024>}]} {
    %c0 = arith.constant 0 : index
    %c0_0 = arith.constant 0 : index
    %0 = vector.load %arg1[%c0, %c0_0] : memref<2x1024xf32, #tpu.memory_space<vmem>>, vector<2x1024xf32>
    %1 = math.floor %0 : vector<2x1024xf32>
    %c0_1 = arith.constant 0 : index
    %c0_2 = arith.constant 0 : index
    %2 = vector.load %arg2[%c0_1, %c0_2] : memref<2x1024xf32, #tpu.memory_space<vmem>>, vector<2x1024xf32>
    tpu.vector_store %arg2[%c0_1, %c0_2], %1 {strides = array<i32>} : memref<2x1024xf32, #tpu.memory_space<vmem>>, vector<2x1024xf32>,
    return
  }
  func.func @transform_0(%arg0: i32) -> (i32, i32) {
    %c0_i32 = arith.constant 0 : i32
    %c0_i32_0 = arith.constant 0 : i32
    return %arg0, %c0_i32 : i32, i32
  }
  func.func @transform_1(%arg0: i32) -> (i32, i32) {
    %c0_i32 = arith.constant 0 : i32
    %c0_i32_0 = arith.constant 0 : i32
    return %arg0, %c0_i32 : i32, i32
  }
}

</mosaic_0001>

<llo_original>
// kernel: tpu_custom_call.1
$region0: #{tpu_custom_call.1}
  #allocation0 [shape = 'u32[]', space=smem, size = 0x4, offset = 0x4, fixed_abs, tag = 'smem constant byte address 0x4 - core index']
  #allocation1 [shape = 'u32[144,128]{1,0:T(1,128)}', space=vmem, size = 0x12000, scoped, tag = 'internal scratch']
  %s0 = inlined_call_operand.hbm [shape: f32[2,1024], index: 0, kind: input, shape index: {}]
  %s1 = inlined_call_operand.hbm [shape: f32[2,1024], index: 1, kind: output, shape index: {}]
  %s2 = sld [smem:[#allocation0]]
  $region18: #{tpu_custom_call.1} parent=0
    _
  %s4 = ssub.s32 1, %s2
  %s5 = scalar_select 0, %s4, %s2
  $region1: #{tpu_custom_call.1} parent=0
    #allocation2 [shape = 'u8[8192]{0}', space=vmem, size = 0x2000, scoped, tag = 'input window, operand 0, single buffered']
    #allocation3 [shape = 's32[1]{0}', space=sflag, size = 0x4, scoped, tag = 'scoped memory for tpu_custom_call.1']
    #allocation4 [shape = 's32[1]{0}', space=sflag, size = 0x4, scoped, tag = 'scoped memory for tpu_custom_call.1']
    #allocation5 [shape = 'u8[8192]{0}', space=vmem, size = 0x2000, scoped, tag = 'output window, operand 0, single buffered']
    %6 = vsyncpa [#allocation3], 0
    %7 = vsyncpa [#allocation4], 0
    // Predicated region
    $region2: #{tpu_custom_call.1} parent=1 // pred_check
      _
    $region3: #{tpu_custom_call.1} parent=1 // pred_check_branch
      %9 = sbr.rel (0) target = $region5
    $region4: #{tpu_custom_call.1} parent=1 // pred_region
      %s11 = ssub.s32 256, 256
      %12 = vsyncadd [#allocation3], %s11
      %s14 = sshll.u32 [#allocation2], 4
      %s15 = int_to_ptr.vmem [resolvable:$true] %s14
      %17 = dma.hbm_to_vmem [thread:$0]  %s0, 256, %s15, [#allocation3]
    $region5: #{tpu_custom_call.1} parent=1 // pred_fallthru
      _
    // Predicated region
    $region6: #{tpu_custom_call.1} parent=1 // pred_check
      _
    $region7: #{tpu_custom_call.1} parent=1 // pred_check_branch
      %19 = sbr.rel (0) target = $region9
    $region8: #{tpu_custom_call.1} parent=1 // pred_region
      %20 = dma.done [#allocation3], 256
    $region9: #{tpu_custom_call.1} parent=1 // pred_fallthru
      _
    %v21 = vld [vmem:[#allocation2] sm:$0xff]
    %v22 = vld [vmem:[#allocation2 + $0x8] sm:$0xff]
    %v23 = vfloor.f32 %v21
    %v24 = vfloor.f32 %v22
    %25 = vst [vmem:[#allocation5] sm:$0xff] %v23
    %26 = vst [vmem:[#allocation5 + $0x8] sm:$0xff] %v24
    // Predicated region
    $region10: #{tpu_custom_call.1} parent=1 // pred_check
      _
    $region11: #{tpu_custom_call.1} parent=1 // pred_check_branch
      %28 = sbr.rel (0) target = $region13
    $region12: #{tpu_custom_call.1} parent=1 // pred_region
      %s30 = ssub.s32 256, 256
      %31 = vsyncadd [#allocation4], %s30
      %s33 = sshll.u32 [#allocation5], 4
      %s34 = int_to_ptr.vmem [resolvable:$true] %s33
      %36 = dma.vmem_to_hbm [thread:$0]  %s34, 256, %s1, [#allocation4]
    $region13: #{tpu_custom_call.1} parent=1 // pred_fallthru
      _
    // Predicated region
    $region14: #{tpu_custom_call.1} parent=1 // pred_check
      _
    $region15: #{tpu_custom_call.1} parent=1 // pred_check_branch
      %38 = sbr.rel (0) target = $region17
    $region16: #{tpu_custom_call.1} parent=1 // pred_region
      %39 = dma.done [#allocation4], 256
    $region17: #{tpu_custom_call.1} parent=1 // pred_fallthru
      _
    %40 = vsyncpa [#allocation3], 1
    %41 = vsyncpa [#allocation4], 1

</llo_original>
